<compile_context>
chip_gen: v7x
topology: tpu7x:2x2x1
jax: 0.10.0
libtpu: 0.0.40
codegen_flags: <defaults>
</compile_context>

<pallas_src>
import functools
import math

import jax
import jax.numpy as jnp
from jax import lax
from jax.experimental import pallas as pl
from jax.experimental.pallas import tpu as pltpu


_ROWS_PER_GROUP = 8            # sublane height of one aligned output store
_DEFAULT_VMEM_CAP = 64 << 20   # conservative fallback (v7x per-TensorCore VMEM)


def _round_up(x, m):
    return ((x + m - 1) // m) * m


def _vmem_capacity_bytes():
    try:
        cap = int(getattr(pltpu.get_tpu_info(), "vmem_capacity_bytes", 0))
        if cap > 0:
            return cap
    except Exception:
        pass
    return _DEFAULT_VMEM_CAP


# ---------------------------------------------------------------------------
# Path 1: table resident in VMEM (the realistic abilitydex case).
# ---------------------------------------------------------------------------
def _resident_gather_kernel(ids_ref, tab_ref, out_ref, *, group, unroll):
    # ids_ref : (T_pad,) int32 in SMEM (scalar prefetch, full array)
    # tab_ref : (V, 1, D) table, fully resident in VMEM (constant index_map)
    # out_ref : (TT, D) lane-dense output tile for token tile `i`
    i = pl.program_id(0)
    tt, d = out_ref.shape
    base = i * tt

    def body(gi, carry):
        j0 = pl.multiple_of(gi * group, group)
        rows = [tab_ref[ids_ref[base + j0 + u]].reshape(1, d) for u in range(group)]
        out_ref[pl.ds(j0, group), :] = jnp.concatenate(rows, axis=0)
        return carry

    lax.fori_loop(0, tt // group, body, 0, unroll=unroll)


# ---------------------------------------------------------------------------
# Path 2: table stays in HBM; data-dependent per-row DMAs via pl.Element.
# ---------------------------------------------------------------------------
def _hbm_gather_kernel(ids_ref, *refs):
    # refs = (row_ref_0, ..., row_ref_{G-1}, out_ref); each row_ref holds the
    # (1, D) table row selected by its Element index_map.
    del ids_ref                      # consumed by the index_maps only
    out_ref = refs[-1]
    d = out_ref.shape[-1]
    for u, row_ref in enumerate(refs[:-1]):
        out_ref[pl.ds(u, 1), :] = row_ref[...].reshape(1, d)


@functools.partial(jax.jit, static_argnames=("token_tile", "force_table_in_hbm"))
def ability_embedding_forward(x, table, *, token_tile=256, force_table_in_hbm=False):
    """x: integer ids (any shape); table: (V, D) -> x.shape + (D,) in table.dtype."""
    orig_shape = tuple(x.shape)
    v, d = table.shape
    t = int(math.prod(orig_shape))
    elt = jnp.dtype(table.dtype).itemsize
    g = _ROWS_PER_GROUP

    # torch.nn.Embedding raises on out-of-range ids; clamp instead so the
    # gather never touches out-of-bounds memory.
    ids = jnp.clip(x.reshape(t).astype(jnp.int32), 0, v - 1)

    # Generation-aware VMEM budget (64 MiB on v7x, 128 MiB on v5e/v6e).
    cap = _vmem_capacity_bytes()
    usable = max(16 << 20, cap - (8 << 20))          # headroom for Mosaic scratch
    d_pad = _round_up(d, 128)
    row_vmem = 32 * d_pad                            # one sublane-padded (1, D) row
    table_vmem = 2 * v * row_vmem                    # 2 pipeline buffers (DMA'd once)

    def out_tile_vmem(tt_):
        return 2 * tt_ * d_pad * elt                 # double-buffered output tile

    resident = (not force_table_in_hbm) and (
        table_vmem + out_tile_vmem(g) + (1 << 20) <= usable)

    if resident:
        # Token tile: big enough to amortize grid-step overhead, small enough to
        # fit the budget, and >= 2 tiles so both v7x TensorCores get work.
        n_tiles = max(1, pl.cdiv(t, token_tile))
        tt = max(g, _round_up(pl.cdiv(t, n_tiles), g))
        while tt > g and table_vmem + out_tile_vmem(tt) > usable:
            tt = max(g, _round_up(tt // 2, g))
        if tt > g and _round_up(t, tt) // tt < 2:
            tt = max(g, _round_up(pl.cdiv(t, 2), g))
        t_pad = _round_up(t, tt)
        if t_pad != t:
            ids = jnp.pad(ids, (0, t_pad - t))       # pad id 0 (in range); sliced off

        vmem_limit = int(min(cap - (2 << 20),
                             max(table_vmem + out_tile_vmem(tt) + (4 << 20), 32 << 20)))
        kernel = functools.partial(_resident_gather_kernel, group=g,
                                   unroll=max(1, min(4, tt // g)))
        out = pl.pallas_call(
            kernel,
            out_shape=jax.ShapeDtypeStruct((t_pad, d), table.dtype),
            grid_spec=pltpu.PrefetchScalarGridSpec(
                num_scalar_prefetch=1,
                grid=(t_pad // tt,),
                in_specs=[
                    # Whole table, one row per leading-dim tile; constant
                    # index_map => a single HBM->VMEM DMA for the whole grid.
                    pl.BlockSpec((v, 1, d), lambda i, ids_ref: (0, 0, 0)),
                ],
                out_specs=pl.BlockSpec((tt, d), lambda i, ids_ref: (i, 0)),
            ),
            compiler_params=pltpu.CompilerParams(
                dimension_semantics=("parallel",),
                vmem_limit_bytes=vmem_limit,
            ),
        )(ids, table.reshape(v, 1, d))
    else:
        # Table too big for VMEM: fetch exactly the rows we need straight from
        # HBM via data-dependent Element index_maps, g rows per grid step.
        t_pad = _round_up(t, g)
        if t_pad != t:
            ids = jnp.pad(ids, (0, t_pad - t))

        def row_spec(u):
            return pl.BlockSpec((pl.Element(1), d),
                                lambda i, ids_ref, u=u: (ids_ref[i * g + u], 0))

        out = pl.pallas_call(
            _hbm_gather_kernel,
            out_shape=jax.ShapeDtypeStruct((t_pad, d), table.dtype),
            grid_spec=pltpu.PrefetchScalarGridSpec(
                num_scalar_prefetch=1,
                grid=(t_pad // g,),
                in_specs=[row_spec(u) for u in range(g)],
                out_specs=pl.BlockSpec((g, d), lambda i, ids_ref: (i, 0)),
            ),
            compiler_params=pltpu.CompilerParams(
                dimension_semantics=("arbitrary",),
            ),
        )(ids, *([table] * g))

    if t_pad != t:
        out = out[:t]
    return out.reshape(*orig_shape, d)


if __name__ == "__main__":
    key = jax.random.PRNGKey(0)
    k_tab, k_idx, k_tab2, k_idx2 = jax.random.split(key, 4)

    # Case 1: demo-sized "abilitydex" (V=64 abilities, D=128), batch=2, seq=8.
    num_embeddings, embedding_dim = 64, 128
    batch, seq = 2, 8
    table = jax.random.normal(k_tab, (num_embeddings, embedding_dim), jnp.float32)
    x = jax.random.randint(k_idx, (batch, seq), 0, num_embeddings, jnp.int32)

    y = jax.block_until_ready(ability_embedding_forward(x, table))
    y_ref = jnp.take(table, x.reshape(-1), axis=0).reshape(batch, seq, embedding_dim)
    assert y.shape == (batch, seq, embedding_dim)
    assert y.dtype == jnp.float32
    assert jnp.array_equal(y, y_ref)        # true gather -> bit-exact

    # Case 2: larger vocab + multiple token tiles (still resident in VMEM).
    v2, d2, b2, s2 = 200, 128, 4, 96
    table2 = jax.random.normal(k_tab2, (v2, d2), jnp.float32)
    x2 = jax.random.randint(k_idx2, (b2, s2), 0, v2, jnp.int32)
    y2 = jax.block_until_ready(ability_embedding_forward(x2, table2, token_tile=256))
    y2_ref = jnp.take(table2, x2.reshape(-1), axis=0).reshape(b2, s2, d2)
    assert jnp.array_equal(y2, y2_ref)

    # Case 3: exercise the HBM per-row-DMA fallback (tables too big for VMEM).
    y3 = jax.block_until_ready(
        ability_embedding_forward(x2, table2, force_table_in_hbm=True))
    assert jnp.array_equal(y3, y2_ref)

    print("KERNEL_OK")
</pallas_src>

<mosaic_0001>
module attributes {stable_mosaic.version = 11 : i64} {
  func.func @_resident_gather_kernel(%arg0: i32, %arg1: memref<16xi32, #tpu.memory_space<smem>>, %arg2: memref<64x1x128xf32, #tpu.memory_space<vmem>>, %arg3: memref<8x128xf32, #tpu.memory_space<vmem>>) attributes {dimension_semantics = [#tpu.dimension_semantics<parallel>], iteration_bounds = array<i64: 2>, scalar_prefetch = 1 : i64, scratch_operands = 0 : i64, tpu.core_type = #tpu.core_type<tc>, window_params = [{pipeline_mode = #tpu.pipeline_mode<synchronous>, transform_indices = @transform_0, window_bounds = array<i64: 64, 1, 128>}, {transform_indices = @transform_1, window_bounds = array<i64: 8, 128>}]} {
    %c8_i32 = arith.constant 8 : i32
    %0 = arith.muli %arg0, %c8_i32 : i32
    %c0_i32 = arith.constant 0 : i32
    %c8_i32_0 = arith.constant 8 : i32
    %1 = arith.muli %c0_i32, %c8_i32_0 : i32
    %2 = tpu.assume_multiple %1, 8 : i32
    %3 = arith.addi %0, %2 : i32
    %c0_i32_1 = arith.constant 0 : i32
    %4 = arith.addi %3, %c0_i32_1 : i32
    %5 = arith.index_cast %4 : i32 to index
    %6 = memref.load %arg1[%5] : memref<16xi32, #tpu.memory_space<smem>>
    %7 = arith.index_cast %6 : i32 to index
    %c0 = arith.constant 0 : index
    %c0_2 = arith.constant 0 : index
    %8 = vector.load %arg2[%7, %c0, %c0_2] : memref<64x1x128xf32, #tpu.memory_space<vmem>>, vector<1x1x128xf32>
    %9 = vector.shape_cast %8 : vector<1x1x128xf32> to vector<1x128xf32>
    %10 = arith.addi %0, %2 : i32
    %c1_i32 = arith.constant 1 : i32
    %11 = arith.addi %10, %c1_i32 : i32
    %12 = arith.index_cast %11 : i32 to index
    %13 = memref.load %arg1[%12] : memref<16xi32, #tpu.memory_space<smem>>
    %14 = arith.index_cast %13 : i32 to index
    %c0_3 = arith.constant 0 : index
    %c0_4 = arith.constant 0 : index
    %15 = vector.load %arg2[%14, %c0_3, %c0_4] : memref<64x1x128xf32, #tpu.memory_space<vmem>>, vector<1x1x128xf32>
    %16 = vector.shape_cast %15 : vector<1x1x128xf32> to vector<1x128xf32>
    %17 = arith.addi %0, %2 : i32
    %c2_i32 = arith.constant 2 : i32
    %18 = arith.addi %17, %c2_i32 : i32
    %19 = arith.index_cast %18 : i32 to index
    %20 = memref.load %arg1[%19] : memref<16xi32, #tpu.memory_space<smem>>
    %21 = arith.index_cast %20 : i32 to index
    %c0_5 = arith.constant 0 : index
    %c0_6 = arith.constant 0 : index
    %22 = vector.load %arg2[%21, %c0_5, %c0_6] : memref<64x1x128xf32, #tpu.memory_space<vmem>>, vector<1x1x128xf32>
    %23 = vector.shape_cast %22 : vector<1x1x128xf32> to vector<1x128xf32>
    %24 = arith.addi %0, %2 : i32
    %c3_i32 = arith.constant 3 : i32
    %25 = arith.addi %24, %c3_i32 : i32
    %26 = arith.index_cast %25 : i32 to index
    %27 = memref.load %arg1[%26] : memref<16xi32, #tpu.memory_space<smem>>
    %28 = arith.index_cast %27 : i32 to index
    %c0_7 = arith.constant 0 : index
    %c0_8 = arith.constant 0 : index
    %29 = vector.load %arg2[%28, %c0_7, %c0_8] : memref<64x1x128xf32, #tpu.memory_space<vmem>>, vector<1x1x128xf32>
    %30 = vector.shape_cast %29 : vector<1x1x128xf32> to vector<1x128xf32>
    %31 = arith.addi %0, %2 : i32
    %c4_i32 = arith.constant 4 : i32
    %32 = arith.addi %31, %c4_i32 : i32
    %33 = arith.index_cast %32 : i32 to index
    %34 = memref.load %arg1[%33] : memref<16xi32, #tpu.memory_space<smem>>
    %35 = arith.index_cast %34 : i32 to index
    %c0_9 = arith.constant 0 : index
    %c0_10 = arith.constant 0 : index
    %36 = vector.load %arg2[%35, %c0_9, %c0_10] : memref<64x1x128xf32, #tpu.memory_space<vmem>>, vector<1x1x128xf32>
    %37 = vector.shape_cast %36 : vector<1x1x128xf32> to vector<1x128xf32>
    %38 = arith.addi %0, %2 : i32
    %c5_i32 = arith.constant 5 : i32
    %39 = arith.addi %38, %c5_i32 : i32
    %40 = arith.index_cast %39 : i32 to index
    %41 = memref.load %arg1[%40] : memref<16xi32, #tpu.memory_space<smem>>
    %42 = arith.index_cast %41 : i32 to index
    %c0_11 = arith.constant 0 : index
    %c0_12 = arith.constant 0 : index
    %43 = vector.load %arg2[%42, %c0_11, %c0_12] : memref<64x1x128xf32, #tpu.memory_space<vmem>>, vector<1x1x128xf32>
    %44 = vector.shape_cast %43 : vector<1x1x128xf32> to vector<1x128xf32>
    %45 = arith.addi %0, %2 : i32
    %c6_i32 = arith.constant 6 : i32
    %46 = arith.addi %45, %c6_i32 : i32
    %47 = arith.index_cast %46 : i32 to index
    %48 = memref.load %arg1[%47] : memref<16xi32, #tpu.memory_space<smem>>
    %49 = arith.index_cast %48 : i32 to index
    %c0_13 = arith.constant 0 : index
    %c0_14 = arith.constant 0 : index
    %50 = vector.load %arg2[%49, %c0_13, %c0_14] : memref<64x1x128xf32, #tpu.memory_space<vmem>>, vector<1x1x128xf32>
    %51 = vector.shape_cast %50 : vector<1x1x128xf32> to vector<1x128xf32>
    %52 = arith.addi %0, %2 : i32
    %c7_i32 = arith.constant 7 : i32
    %53 = arith.addi %52, %c7_i32 : i32
    %54 = arith.index_cast %53 : i32 to index
    %55 = memref.load %arg1[%54] : memref<16xi32, #tpu.memory_space<smem>>
    %56 = arith.index_cast %55 : i32 to index
    %c0_15 = arith.constant 0 : index
    %c0_16 = arith.constant 0 : index
    %57 = vector.load %arg2[%56, %c0_15, %c0_16] : memref<64x1x128xf32, #tpu.memory_space<vmem>>, vector<1x1x128xf32>
    %58 = vector.shape_cast %57 : vector<1x1x128xf32> to vector<1x128xf32>
    %59 = tpu.concatenate %9, %16, %23, %30, %37, %44, %51, %58 in 0 : vector<1x128xf32>, vector<1x128xf32>, vector<1x128xf32>, vector<1x128xf32>, vector<1x128xf32>, vector<1x128xf32>, vector<1x128xf32>, vector<1x128xf32> -> vector<8x128xf32>
    %60 = arith.index_cast %2 : i32 to index
    %c0_17 = arith.constant 0 : index
    %61 = vector.load %arg3[%60, %c0_17] : memref<8x128xf32, #tpu.memory_space<vmem>>, vector<8x128xf32>
    tpu.vector_store %arg3[%60, %c0_17], %59 {strides = array<i32>} : memref<8x128xf32, #tpu.memory_space<vmem>>, vector<8x128xf32>,
    %c1_i32_18 = arith.constant 1 : i32
    return
  }
  func.func @transform_0(%arg0: i32, %arg1: memref<16xi32, #tpu.memory_space<smem>>) -> (i32, i32, i32) {
    %c0_i32 = arith.constant 0 : i32
    %c0_i32_0 = arith.constant 0 : i32
    %c0_i32_1 = arith.constant 0 : i32
    %c0_i32_2 = arith.constant 0 : i32
    return %c0_i32, %c0_i32_0, %c0_i32_1 : i32, i32, i32
  }
  func.func @transform_1(%arg0: i32, %arg1: memref<16xi32, #tpu.memory_space<smem>>) -> (i32, i32) {
    %c0_i32 = arith.constant 0 : i32
    %c0_i32_0 = arith.constant 0 : i32
    return %arg0, %c0_i32 : i32, i32
  }
}

</mosaic_0001>

<llo_original>
// kernel: ability_embedding_forward.1
$region0: #{ability_embedding_forward.1}
  #allocation0 [shape = 'u32[]', space=smem, size = 0x4, offset = 0x4, fixed_abs, tag = 'smem constant byte address 0x4 - core index']
  #allocation1 [shape = 'u32[144,128]{1,0:T(1,128)}', space=vmem, size = 0x12000, scoped, tag = 'internal scratch']
  #allocation2 [shape = 's32[1]{0}', space=sflag, size = 0x4, scoped, tag = 'scoped memory for ability_embedding_forward.1']
  #allocation3 [shape = 'u8[512]{0}', space=smem, size = 0x200, scoped, tag = 'prefetched SMEM operand 0']
  %s0 = inlined_call_operand.vmem [shape: s32[16], index: 0, kind: input, shape index: {}]
  %s1 = inlined_call_operand.hbm [shape: f32[64,1,128], index: 1, kind: input, shape index: {}]
  %s2 = inlined_call_operand.hbm [shape: f32[16,128], index: 2, kind: output, shape index: {}]
  %s3 = sld [smem:[#allocation0]]
  $region41: #{ability_embedding_forward.1} parent=0
    _
  %s5 = ssub.s32 1, %s3
  %s6 = scalar_select 0, %s5, %s3
  %s7 = sshll.u32 %s0, 4
  %s8 = int_to_ptr.vmem [resolvable:$true] %s7
  %10 = dma.vmem_to_smem %s8, 16, [#allocation3], [#allocation2]
  %11 = dma.done [#allocation2], 16
  %12 = sfence
  $region1: #{ability_embedding_forward.1} parent=0
    #allocation4 [shape = 'u8[32768]{0}', space=vmem, size = 0x8000, scoped, tag = 'input window, operand 1, single buffered']
    #allocation5 [shape = 's32[2]{0}', space=sflag, size = 0x8, scoped, tag = 'scoped memory for ability_embedding_forward.1']
    #allocation6 [shape = 's32[2]{0}', space=sflag, size = 0x8, scoped, tag = 'scoped memory for ability_embedding_forward.1']
    #allocation7 [shape = 'u8[8192]{0}', space=vmem, size = 0x2000, scoped, tag = 'output window, operand 0']
    %13 = vsyncpa [#allocation5], 0
    %14 = vsyncpa [#allocation6], 0
    %s15 = scalar_lea.sflag [#allocation6], 1
    %16 = vsyncpa %s15, 0
    loop: start=0, step=1, limit=4
    $region2: #{ability_embedding_forward.1} parent=1 // loop_pre_header
      _
    $region3: #{ability_embedding_forward.1} parent=1 // loop_header
      %s18 = sphi 0, %s22
      %p19 = scmp.ge.s32.totalorder %s18, 4
      %s26 = sphi 0, %s26
      %s28 = sphi 0, %s26
      %s29 = sphi 0, %s28
      %s43 = sphi 0, %s29
      %s49 = sphi 0, %s51
      %s52 = sphi 0, %s49
      %s53 = sphi 0, %s52
      %s69 = sphi 0, %s53
    $region4: #{ability_embedding_forward.1} parent=1 // loop_header_branch
      %21 = sbr.rel (%p19) target = $region8
    $region5: #{ability_embedding_forward.1} parent=1 // loop_body
      %s23 = ssub.s32 %s18, 1
      %s24 = ssub.s32 %s18, 2
      %s25 = sadd.s32 %s18, 1
      %s27 = sadd.s32 %s26, 1
      %p30 = scmp.eq.s32.totalorder %s18, 1
      %p31 = scmp.ne.s32.totalorder %s26, %s28
      %p32 = scmp.eq.s32.totalorder %s18, 0
      %p33 = por %p31, %p32
      %p34 = scmp.ne.s32.totalorder %s26, %s28
      %p35 = scmp.eq.s32.totalorder %s23, 1
      %p36 = por %p34, %p35
      %p37 = scmp.ne.s32.totalorder %s28, %s29
      %p38 = scmp.eq.s32.totalorder %s23, 0
      %p39 = por %p37, %p38
      %p40 = scmp.ne.s32.totalorder %s28, %s29
      %p41 = scmp.eq.s32.totalorder %s24, 1
      %p42 = por %p40, %p41
      %p44 = scmp.ne.s32.totalorder %s29, %s43
      %p45 = scmp.eq.s32.totalorder %s24, 0
      %p46 = por %p44, %p45
      %s47 = ssub.s32 %s18, %s25
      %p48 = scmp.eq.s32.totalorder %s47, 0
      %s50 = sadd.s32 %s49, 1
      %s51 = scalar_select %p48, %s49, %s50
      %p54 = pneg %p48
      %p55 = scmp.eq.s32.totalorder %s18, 1
      %p56 = por %p54, %p55
      %p57 = scmp.ne.s32.totalorder %s49, %s52
      %p58 = scmp.eq.s32.totalorder %s18, 0
      %p59 = por %p57, %p58
      %p60 = scmp.ne.s32.totalorder %s49, %s52
      %p61 = scmp.eq.s32.totalorder %s23, 1
      %p62 = por %p60, %p61
      %p63 = scmp.ne.s32.totalorder %s52, %s53
      %p64 = scmp.eq.s32.totalorder %s23, 0
      %p65 = por %p63, %p64
      %p66 = scmp.ne.s32.totalorder %s52, %s53
      %p67 = scmp.eq.s32.totalorder %s24, 1
      %p68 = por %p66, %p67
      %p70 = scmp.ne.s32.totalorder %s53, %s69
      %p71 = scmp.eq.s32.totalorder %s24, 0
      %p72 = por %p70, %p71
      %p73 = scmp.le.s32.totalorder 1, %s18
      %p74 = scmp.lt.s32.totalorder %s18, 3
      %p75 = pnand %p73, %p74
      %p76 = pneg %p75
      // Predicated region
      $region9: #{ability_embedding_forward.1} parent=5 // pred_check
        _
      $region10: #{ability_embedding_forward.1} parent=5 // pred_check_branch
        %78 = sbr.rel (%p75) target = $region12
      $region11: #{ability_embedding_forward.1} parent=5 // pred_region
        %s79 = ssub.s32 %s18, 1
        // Predicated region
        $region13: #{ability_embedding_forward.1} parent=11 // pred_check
          %p80 = pneg %p39
        $region14: #{ability_embedding_forward.1} parent=11 // pred_check_branch
          %82 = sbr.rel (%p80) target = $region16
        $region15: #{ability_embedding_forward.1} parent=11 // pred_region
          %s84 = ssub.s32 1024, 1024
          %85 = vsyncadd [#allocation5], %s84
          %s86 = sshll.u32 [#allocation4], 4
          %s87 = int_to_ptr.vmem [resolvable:$true] %s86
          %92 = dma.hbm_to_vmem [thread:$0]  %s1, 1024, %s87, [#allocation5], 16, 16, 1
        $region16: #{ability_embedding_forward.1} parent=11 // pred_fallthru
          _
      $region12: #{ability_embedding_forward.1} parent=5 // pred_fallthru
        _
      %p93 = scmp.lt.s32.totalorder %s18, 2
      // Predicated region
      $region17: #{ability_embedding_forward.1} parent=5 // pred_check
        %p94 = pneg %p93
      $region18: #{ability_embedding_forward.1} parent=5 // pred_check_branch
        %96 = sbr.rel (%p94) target = $region20
      $region19: #{ability_embedding_forward.1} parent=5 // pred_region
        _
      $region20: #{ability_embedding_forward.1} parent=5 // pred_fallthru
        _
      %p97 = scmp.le.s32.totalorder 1, %s18
      %p98 = scmp.lt.s32.totalorder %s18, 3
      %p99 = pnand %p97, %p98
      %p100 = pneg %p99
      // Predicated region
      $region21: #{ability_embedding_forward.1} parent=5 // pred_check
        _
      $region22: #{ability_embedding_forward.1} parent=5 // pred_check_branch
        %102 = sbr.rel (%p99) target = $region24
      $region23: #{ability_embedding_forward.1} parent=5 // pred_region
        %s103 = ssub.s32 %s18, 1
        // Predicated region
        $region25: #{ability_embedding_forward.1} parent=23 // pred_check
          %p104 = pneg %p39
        $region26: #{ability_embedding_forward.1} parent=23 // pred_check_branch
          %106 = sbr.rel (%p104) target = $region28
        $region27: #{ability_embedding_forward.1} parent=23 // pred_region
          %107 = dma.done [#allocation5], 1024
        $region28: #{ability_embedding_forward.1} parent=23 // pred_fallthru
          _
        %p108 = pneg %p39
        %p109 = pneg %p36
        %p110 = pneg %p65
        %p111 = pneg %p62
        %s112 = sand.u32 %s52, 1
        %s113 = scalar_lea.sflag [#allocation6], %s112
        %s114 = sand.u32 %s52, 1
        %s115 = smul.addr %s114, 8
        %s116 = scalar_lea.vmem [#allocation7], %s115
        %s117 = smul.u32 %s23, 8
        %s118 = sadd.s32 %s117, 0
        %s119 = sld [smem:[#allocation3 + %s118]]
        %s120 = scalar_lea.vmem [#allocation4], %s119
        %v121 = vld [vmem:[%s120] sm:$0x1]
        %s122 = sadd.s32 %s118, 1
        %s123 = sld [smem:[#allocation3 + %s122]]
        %s124 = scalar_lea.vmem [#allocation4], %s123
        %v125 = vld [vmem:[%s124] sm:$0x1]
        %s126 = sadd.s32 %s118, 2
        %s127 = sld [smem:[#allocation3 + %s126]]
        %s128 = scalar_lea.vmem [#allocation4], %s127
        %v129 = vld [vmem:[%s128] sm:$0x1]
        %s130 = sadd.s32 %s118, 3
        %s131 = sld [smem:[#allocation3 + %s130]]
        %s132 = scalar_lea.vmem [#allocation4], %s131
        %v133 = vld [vmem:[%s132] sm:$0x1]
        %s134 = sadd.s32 %s118, 4
        %s135 = sld [smem:[#allocation3 + %s134]]
        %s136 = scalar_lea.vmem [#allocation4], %s135
        %v137 = vld [vmem:[%s136] sm:$0x1]
        %s138 = sadd.s32 %s118, 5
        %s139 = sld [smem:[#allocation3 + %s138]]
        %s140 = scalar_lea.vmem [#allocation4], %s139
        %v141 = vld [vmem:[%s140] sm:$0x1]
        %s142 = sadd.s32 %s118, 6
        %s143 = sld [smem:[#allocation3 + %s142]]
        %s144 = scalar_lea.vmem [#allocation4], %s143
        %v145 = vld [vmem:[%s144] sm:$0x1]
        %s146 = sadd.s32 %s118, 7
        %s147 = sld [smem:[#allocation3 + %s146]]
        %s148 = scalar_lea.vmem [#allocation4], %s147
        %v149 = vld [vmem:[%s148] sm:$0x1]
        %v151 = vlaneseq
        %v152 = vshrl.u32 %v151, 7
        %v153 = vsub.s32 0, %v152
        %v154 = vrot.slane %v125, %v153
        %v157 = vlaneseq
        %v158 = vshrl.u32 %v157, 7
        %v159 = vsub.s32 0, %v158
        %v160 = vrot.slane %v129, %v159
        %v163 = vlaneseq
        %v164 = vshrl.u32 %v163, 7
        %v165 = vsub.s32 0, %v164
        %v166 = vrot.slane %v133, %v165
        %v169 = vlaneseq
        %v170 = vshrl.u32 %v169, 7
        %v171 = vsub.s32 0, %v170
        %v172 = vrot.slane %v137, %v171
        %v175 = vlaneseq
        %v176 = vshrl.u32 %v175, 7
        %v177 = vsub.s32 0, %v176
        %v178 = vrot.slane %v141, %v177
        %v181 = vlaneseq
        %v182 = vshrl.u32 %v181, 7
        %v183 = vsub.s32 0, %v182
        %v184 = vrot.slane %v145, %v183
        %v187 = vlaneseq
        %v188 = vshrl.u32 %v187, 7
        %v189 = vsub.s32 0, %v188
        %v190 = vrot.slane %v149, %v189
        %vm192 = vcmask 1040384
        %v193 = vsel %vm192, %v121, %v154
        %vm194 = vcmask 1041408
        %v195 = vsel %vm194, %v193, %v160
        %vm196 = vcmask 1042432
        %v197 = vsel %vm196, %v195, %v166
        %vm198 = vcmask 1043456
        %v199 = vsel %vm198, %v197, %v172
        %vm200 = vcmask 1044480
        %v201 = vsel %vm200, %v199, %v178
        %vm202 = vcmask 1045504
        %v203 = vsel %vm202, %v201, %v184
        %vm204 = vcmask 1046528
        %v205 = vsel %vm204, %v203, %v190
        %206 = vst [vmem:[%s116] sm:$0xff] %v205
        %s207 = sand.u32 %s52, 1
        %s208 = scalar_lea.sflag [#allocation6], %s207
        %s209 = sand.u32 %s52, 1
        %s210 = smul.addr %s209, 8
        %s211 = scalar_lea.vmem [#allocation7], %s210
        // Predicated region
        $region29: #{ability_embedding_forward.1} parent=23 // pred_check
          %p212 = pneg %p62
        $region30: #{ability_embedding_forward.1} parent=23 // pred_check_branch
          %214 = sbr.rel (%p212) target = $region32
        $region31: #{ability_embedding_forward.1} parent=23 // pred_region
          %s216 = ssub.s32 128, 128
          %217 = vsyncadd %s208, %s216
          %s218 = smul.addr %s23, 128
          %s219 = scalar_lea.hbm %s2, %s218
          %s221 = sshll.u32 %s211, 4
          %s222 = int_to_ptr.vmem [resolvable:$true] %s221
          %224 = dma.vmem_to_hbm [thread:$0]  %s222, 128, %s219, %s208
        $region32: #{ability_embedding_forward.1} parent=23 // pred_fallthru
          _
      $region24: #{ability_embedding_forward.1} parent=5 // pred_fallthru
        _
      %p225 = scmp.le.s32.totalorder 2, %s18
      // Predicated region
      $region33: #{ability_embedding_forward.1} parent=5 // pred_check
        %p226 = pneg %p225
      $region34: #{ability_embedding_forward.1} parent=5 // pred_check_branch
        %228 = sbr.rel (%p226) target = $region36
      $region35: #{ability_embedding_forward.1} parent=5 // pred_region
        %s229 = ssub.s32 %s18, 2
        // Predicated region
        $region37: #{ability_embedding_forward.1} parent=35 // pred_check
          %p230 = pneg %p68
        $region38: #{ability_embedding_forward.1} parent=35 // pred_check_branch
          %232 = sbr.rel (%p230) target = $region40
        $region39: #{ability_embedding_forward.1} parent=35 // pred_region
          %s233 = sand.u32 %s53, 1
          %s234 = scalar_lea.sflag [#allocation6], %s233
          %s235 = sand.u32 %s53, 1
          %s236 = smul.addr %s235, 8
          %s237 = scalar_lea.vmem [#allocation7], %s236
          %238 = dma.done %s234, 128
        $region40: #{ability_embedding_forward.1} parent=35 // pred_fallthru
          _
      $region36: #{ability_embedding_forward.1} parent=5 // pred_fallthru
        _
    $region6: #{ability_embedding_forward.1} parent=1 // loop_footer
      %s22 = sadd.s32 1, %s18
    $region7: #{ability_embedding_forward.1} parent=1 // loop_footer_branch
      %17 = sbr.rel target = $region3
    $region8: #{ability_embedding_forward.1} parent=1 // loop_exit
      _
    %239 = vsyncpa [#allocation5], 1
    %s240 = scalar_lea.sflag [#allocation5], 1
    %241 = vsyncpa %s240, 1
    %242 = vsyncpa [#allocation6], 1
    %s243 = scalar_lea.sflag [#allocation6], 1
    %244 = vsyncpa %s243, 1

</llo_original>
